<compile_context>
chip_gen: v7x
topology: tpu7x:2x2x1
jax: 0.10.0
libtpu: 0.0.40
codegen_flags: <defaults>
</compile_context>

<pallas_src>
import functools

import jax
import jax.numpy as jnp
from jax import lax
from jax.experimental import pallas as pl
from jax.experimental.pallas import tpu as pltpu

_NUM_PARTIALS = 2  # partial accumulator slabs; maps to the 2 TCs on v7x via "parallel"


def _segment_sum_kernel(b_ref, h_ref, out_ref, *, n_valid, tiles_per_core):
    # b_ref:   (TN, 1)  int32      graph id per node (overhang rows hold garbage)
    # h_ref:   (TN, D)  native dt  node features      (overhang rows hold garbage)
    # out_ref: (1, Gp, D) float32  resident partial accumulator for this slab
    c = pl.program_id(0)            # partial-slab index ("parallel")
    i = pl.program_id(1)            # node-tile index within the slab ("arbitrary")

    @pl.when(i == 0)
    def _init():
        out_ref[...] = jnp.zeros_like(out_ref)

    tn, _ = h_ref.shape
    gp = out_ref.shape[1]

    # Global row indices of this tile; rows past the real node count are masked.
    rows = lax.broadcasted_iota(jnp.int32, (tn, 1), 0) + (c * tiles_per_core + i) * tn
    valid = rows < n_valid                                   # (TN, 1)

    # Mask the features themselves: overhanging block reads are undefined and
    # 0 * NaN would poison the accumulator if we only zeroed the one-hot.
    h = jnp.where(valid, h_ref[...], 0)

    gids = lax.broadcasted_iota(jnp.int32, (tn, gp), 1)      # (TN, Gp)
    onehot = ((gids == b_ref[...]) & valid).astype(h.dtype)  # (TN, Gp)

    # (TN, Gp)^T @ (TN, D) -> (Gp, D): contract over nodes on the MXU, f32 accumulate.
    contrib = lax.dot_general(
        onehot,
        h,
        dimension_numbers=(((0,), (0,)), ((), ())),
        preferred_element_type=jnp.float32,
    )
    out_ref[...] += contrib[None]


def _sum_kernel(h_ref, out_ref, *, n_valid, tiles_per_core):
    # Single-graph path: plain node-axis reduction, no one-hot / id stream.
    c = pl.program_id(0)
    i = pl.program_id(1)

    @pl.when(i == 0)
    def _init():
        out_ref[...] = jnp.zeros_like(out_ref)

    tn = h_ref.shape[0]
    rows = lax.broadcasted_iota(jnp.int32, (tn, 1), 0) + (c * tiles_per_core + i) * tn
    valid = rows < n_valid
    h = jnp.where(valid, h_ref[...], 0).astype(jnp.float32)
    out_ref[...] += jnp.sum(h, axis=0, keepdims=True)[None]


@functools.partial(jax.jit, static_argnames=("num_graphs", "tile_n"))
def decoder_forward(h_atm, x_atm_batch, *, num_graphs, tile_n=None):
    """Pallas segment-sum / sum pooling matching Decoder.forward."""
    n, d = h_atm.shape
    dtype = h_atm.dtype
    itemsize = jnp.dtype(dtype).itemsize
    sub = 8 * max(1, 4 // itemsize)          # sublane tile: 8 (f32), 16 (bf16), 32 (int8)

    # Pick the node-tile size: large enough to amortize pipeline overhead
    # (~2 MiB per h buffer, double-buffered => well under every scoped VMEM default),
    # rounded to the dtype's sublane multiple and capped at the (rounded-up) node count.
    if tile_n is None:
        tn = max(sub, min(1024, (2 * 1024 * 1024) // max(1, d * itemsize)))
    else:
        tn = max(sub, int(tile_n))
    tn = ((tn + sub - 1) // sub) * sub
    tn = min(tn, ((n + sub - 1) // sub) * sub)

    n_tiles = -(-n // tn)
    tiles_per_core = -(-n_tiles // _NUM_PARTIALS)

    def node_tile_index(c, i):
        # Clamp so slots past the last real tile re-read a valid block; their
        # contribution is zeroed by the in-kernel valid-row mask.
        return (jnp.minimum(c * tiles_per_core + i, n_tiles - 1), 0)

    grid = (_NUM_PARTIALS, tiles_per_core)
    cparams = pltpu.CompilerParams(dimension_semantics=("parallel", "arbitrary"))

    if num_graphs == 1:
        kernel = functools.partial(
            _sum_kernel, n_valid=n, tiles_per_core=tiles_per_core)
        partials = pl.pallas_call(
            kernel,
            out_shape=jax.ShapeDtypeStruct((_NUM_PARTIALS, 1, d), jnp.float32),
            grid_spec=pltpu.PrefetchScalarGridSpec(
                num_scalar_prefetch=0,
                grid=grid,
                in_specs=[pl.BlockSpec((tn, d), node_tile_index)],
                out_specs=pl.BlockSpec((1, 1, d), lambda c, i: (c, 0, 0)),
            ),
            compiler_params=cparams,
        )(h_atm)
        # PyTorch single-graph path returns a 1-D [node_dim] tensor.
        return partials.sum(axis=0)[0].astype(dtype)

    # Batched path: one-hot MXU contraction into a resident (Gp, D) accumulator.
    g_pad = max(8, -(-num_graphs // 8) * 8)
    ids = x_atm_batch.astype(jnp.int32).reshape(n, 1)

    kernel = functools.partial(
        _segment_sum_kernel, n_valid=n, tiles_per_core=tiles_per_core)
    partials = pl.pallas_call(
        kernel,
        out_shape=jax.ShapeDtypeStruct((_NUM_PARTIALS, g_pad, d), jnp.float32),
        grid_spec=pltpu.PrefetchScalarGridSpec(
            num_scalar_prefetch=0,
            grid=grid,
            in_specs=[
                pl.BlockSpec((tn, 1), node_tile_index),   # batch-id tile
                pl.BlockSpec((tn, d), node_tile_index),   # feature tile (native dtype)
            ],
            out_specs=pl.BlockSpec((1, g_pad, d), lambda c, i: (c, 0, 0)),
        ),
        compiler_params=cparams,
    )(ids, h_atm)
    return partials.sum(axis=0)[:num_graphs].astype(dtype)


class Decoder:
    """Thin wrapper mirroring the PyTorch module (it holds no learnable params)."""

    def __init__(self, node_dim, out_dim):
        self.node_dim = node_dim
        self.out_dim = out_dim

    def __call__(self, h_atm, x_atm_batch, num_graphs):
        return decoder_forward(h_atm, x_atm_batch, num_graphs=num_graphs)


if __name__ == "__main__":
    key = jax.random.PRNGKey(0)
    k1, k2 = jax.random.split(key)

    node_dim = 32
    out_dim = 32          # unused by forward (as in the PyTorch module)
    n_nodes = 300         # not a multiple of the tile size -> exercises masking
    num_graphs = 3

    h_atm = jax.random.normal(k1, (n_nodes, node_dim), dtype=jnp.float32)
    x_atm_batch = jnp.sort(
        jax.random.randint(k2, (n_nodes,), 0, num_graphs, dtype=jnp.int32)
    )

    dec = Decoder(node_dim, out_dim)
    ref = jax.ops.segment_sum(h_atm, x_atm_batch, num_segments=num_graphs)

    # --- batched path, adaptive (large) tile ---
    pooled = jax.block_until_ready(dec(h_atm, x_atm_batch, num_graphs))
    assert pooled.shape == (num_graphs, node_dim)
    assert jnp.allclose(pooled, ref, atol=1e-4, rtol=1e-4)

    # --- batched path, small explicit tile -> multi-tile + ragged tail + both slabs ---
    pooled_t = jax.block_until_ready(
        decoder_forward(h_atm, x_atm_batch, num_graphs=num_graphs, tile_n=64)
    )
    assert jnp.allclose(pooled_t, ref, atol=1e-4, rtol=1e-4)

    # --- single-graph path (plain sum over nodes, 1-D output) ---
    pooled1 = jax.block_until_ready(dec(h_atm, jnp.zeros((n_nodes,), jnp.int32), 1))
    assert pooled1.shape == (node_dim,)
    assert jnp.allclose(pooled1, h_atm.sum(axis=0), atol=1e-4, rtol=1e-4)

    print("KERNEL_OK")
</pallas_src>

<mosaic_0001>
module attributes {stable_mosaic.version = 11 : i64} {
  func.func @_segment_sum_kernel(%arg0: i32, %arg1: i32, %arg2: memref<304x1xi32, #tpu.memory_space<vmem>>, %arg3: memref<304x32xf32, #tpu.memory_space<vmem>>, %arg4: memref<1x8x32xf32, #tpu.memory_space<vmem>>) attributes {dimension_semantics = [#tpu.dimension_semantics<parallel>, #tpu.dimension_semantics<arbitrary>], iteration_bounds = array<i64: 2, 1>, scalar_prefetch = 0 : i64, scratch_operands = 0 : i64, tpu.core_type = #tpu.core_type<tc>, window_params = [{transform_indices = @transform_0, window_bounds = array<i64: 304, 1>}, {transform_indices = @transform_1, window_bounds = array<i64: 304, 32>}, {transform_indices = @transform_2, window_bounds = array<i64: 1, 8, 32>}]} {
    %c0_i32 = arith.constant 0 : i32
    %0 = arith.cmpi eq, %arg1, %c0_i32 : i32
    %1 = arith.extui %0 : i1 to i32
    %c0_i32_0 = arith.constant 0 : i32
    %2 = arith.cmpi ne, %1, %c0_i32_0 : i32
    scf.if %2 {
      %cst_11 = arith.constant 0.000000e+00 : f32
      %30 = vector.broadcast %cst_11 : f32 to vector<1x8x32xf32>
      %c0_12 = arith.constant 0 : index
      %c0_13 = arith.constant 0 : index
      %c0_14 = arith.constant 0 : index
      %31 = vector.load %arg4[%c0_12, %c0_13, %c0_14] : memref<1x8x32xf32, #tpu.memory_space<vmem>>, vector<1x8x32xf32>
      tpu.vector_store %arg4[%c0_12, %c0_13, %c0_14], %30 {strides = array<i32>} : memref<1x8x32xf32, #tpu.memory_space<vmem>>, vector<1x8x32xf32>,
    } else {
    }
    %3 = tpu.iota {dimensions = array<i32: 0>} : vector<304x1xi32>
    %c1_i32 = arith.constant 1 : i32
    %4 = arith.muli %arg0, %c1_i32 : i32
    %5 = arith.addi %4, %arg1 : i32
    %c304_i32 = arith.constant 304 : i32
    %6 = arith.muli %5, %c304_i32 : i32
    %7 = vector.broadcast %6 : i32 to vector<304x1xi32>
    %8 = arith.addi %3, %7 : vector<304x1xi32>
    %c300_i32 = arith.constant 300 : i32
    %9 = vector.broadcast %c300_i32 : i32 to vector<304x1xi32>
    %10 = arith.cmpi slt, %8, %9 : vector<304x1xi32>
    %c0 = arith.constant 0 : index
    %c0_1 = arith.constant 0 : index
    %11 = vector.load %arg3[%c0, %c0_1] : memref<304x32xf32, #tpu.memory_space<vmem>>, vector<304x32xf32>
    %c0_i32_2 = arith.constant 0 : i32
    %12 = arith.sitofp %c0_i32_2 : i32 to f32
    %13 = vector.shape_cast %10 : vector<304x1xi1> to vector<304x1xi1>
    %14 = vector.broadcast %13 : vector<304x1xi1> to vector<304x32xi1>
    %15 = vector.broadcast %12 : f32 to vector<304x32xf32>
    %16 = arith.select %14, %11, %15 : vector<304x32xi1>, vector<304x32xf32>
    %17 = tpu.iota {dimensions = array<i32: 1>} : vector<304x8xi32>
    %c0_3 = arith.constant 0 : index
    %c0_4 = arith.constant 0 : index
    %18 = vector.load %arg2[%c0_3, %c0_4] : memref<304x1xi32, #tpu.memory_space<vmem>>, vector<304x1xi32>
    %19 = vector.broadcast %18 : vector<304x1xi32> to vector<304x8xi32>
    %20 = arith.cmpi eq, %17, %19 : vector<304x8xi32>
    %21 = vector.broadcast %10 : vector<304x1xi1> to vector<304x8xi1>
    %22 = arith.andi %20, %21 : vector<304x8xi1>
    %23 = arith.extui %22 : vector<304x8xi1> to vector<304x8xi32>
    %24 = arith.sitofp %23 : vector<304x8xi32> to vector<304x8xf32>
    %cst = arith.constant dense<0.000000e+00> : vector<8x32xf32>
    %25 = tpu.matmul %24, %16, %cst {dimension_numbers = #tpu.dot_dimension_numbers<[0], [0], [1], [1], [0, 1, 1, 1], [], []>} : vector<304x8xf32>, vector<304x32xf32>, vector<8x32xf32> -> vector<8x32xf32>
    %c0_5 = arith.constant 0 : index
    %c0_6 = arith.constant 0 : index
    %c0_7 = arith.constant 0 : index
    %26 = vector.load %arg4[%c0_5, %c0_6, %c0_7] : memref<1x8x32xf32, #tpu.memory_space<vmem>>, vector<1x8x32xf32>
    %27 = vector.shape_cast %25 : vector<8x32xf32> to vector<1x8x32xf32>
    %28 = arith.addf %26, %27 : vector<1x8x32xf32>
    %c0_8 = arith.constant 0 : index
    %c0_9 = arith.constant 0 : index
    %c0_10 = arith.constant 0 : index
    %29 = vector.load %arg4[%c0_8, %c0_9, %c0_10] : memref<1x8x32xf32, #tpu.memory_space<vmem>>, vector<1x8x32xf32>
    tpu.vector_store %arg4[%c0_8, %c0_9, %c0_10], %28 {strides = array<i32>} : memref<1x8x32xf32, #tpu.memory_space<vmem>>, vector<1x8x32xf32>,
    return
  }
  func.func @transform_0(%arg0: i32, %arg1: i32) -> (i32, i32) {
    %c1_i32 = arith.constant 1 : i32
    %0 = arith.muli %arg0, %c1_i32 : i32
    %1 = arith.addi %0, %arg1 : i32
    %c0_i32 = arith.constant 0 : i32
    %2 = arith.minsi %1, %c0_i32 : i32
    %c0_i32_0 = arith.constant 0 : i32
    %c0_i32_1 = arith.constant 0 : i32
    return %2, %c0_i32_0 : i32, i32
  }
  func.func @transform_1(%arg0: i32, %arg1: i32) -> (i32, i32) {
    %c1_i32 = arith.constant 1 : i32
    %0 = arith.muli %arg0, %c1_i32 : i32
    %1 = arith.addi %0, %arg1 : i32
    %c0_i32 = arith.constant 0 : i32
    %2 = arith.minsi %1, %c0_i32 : i32
    %c0_i32_0 = arith.constant 0 : i32
    %c0_i32_1 = arith.constant 0 : i32
    return %2, %c0_i32_0 : i32, i32
  }
  func.func @transform_2(%arg0: i32, %arg1: i32) -> (i32, i32, i32) {
    %c0_i32 = arith.constant 0 : i32
    %c0_i32_0 = arith.constant 0 : i32
    %c0_i32_1 = arith.constant 0 : i32
    return %arg0, %c0_i32, %c0_i32_0 : i32, i32, i32
  }
}

</mosaic_0001>

<llo_original>
// kernel: decoder_forward.1
$region0: #{decoder_forward.1}
  #allocation0 [shape = 'u32[]', space=smem, size = 0x4, offset = 0x4, fixed_abs, tag = 'smem constant byte address 0x4 - core index']
  #allocation1 [shape = 'u32[144,128]{1,0:T(1,128)}', space=vmem, size = 0x12000, scoped, tag = 'internal scratch']
  %s0 = inlined_call_operand.vmem [shape: s32[300,1], index: 0, kind: input, shape index: {}]
  %s1 = inlined_call_operand.vmem [shape: f32[300,32], index: 1, kind: input, shape index: {}]
  %s2 = inlined_call_operand.vmem [shape: f32[2,8,32], index: 2, kind: output, shape index: {}]
  %s3 = sld [smem:[#allocation0]]
  $region45: #{decoder_forward.1} parent=0
    _
  %s5 = ssub.s32 1, %s3
  %s6 = scalar_select 0, %s5, %s3
  loop: start=0, step=1, limit=4
  $region2: #{decoder_forward.1} parent=0 // loop_pre_header
    _
  $region3: #{decoder_forward.1} parent=0 // loop_header
    %s8 = sphi 0, %s12
    %p9 = scmp.ge.s32.totalorder %s8, 4
    %s15 = sphi 0, %s27
    %s16 = sphi 0, %s23
    %s17 = sphi 0, %s15
    %s18 = sphi 0, %s16
    %s19 = sphi 0, %s17
    %s20 = sphi 0, %s18
    %s36 = sphi 0, %s38
    %s39 = sphi 0, %s36
    %s40 = sphi 0, %s39
    %s56 = sphi 0, %s40
    %s68 = sphi 0, %s70
    %s71 = sphi 0, %s68
    %s72 = sphi 0, %s71
    %s88 = sphi 0, %s72
    %s94 = sphi 0, %s96
    %s97 = sphi 0, %s94
    %s98 = sphi 0, %s97
    %s114 = sphi 0, %s98
  $region4: #{decoder_forward.1} parent=0 // loop_header_branch
    %11 = sbr.rel (%p9) target = $region8
  $region5: #{decoder_forward.1} parent=0 // loop_body
    %s13 = ssub.s32 %s8, 1
    %s14 = ssub.s32 %s8, 2
    %s21 = sadd.s32 1, %s16
    %p22 = scmp.ge.s32.totalorder %s21, 1
    %s23 = scalar_select %p22, 0, %s21
    %s24 = sadd.s32 1, %s15
    %s25 = scalar_select %p22, %s24, %s15
    %p26 = scmp.ge.s32.totalorder %s25, 2
    %s27 = scalar_select %p26, 0, %s25
    %s28 = sadd.s32 %s15, %s16
    %p29 = scmp.lt.s32.totalorder %s28, 0
    %s30 = scalar_select %p29, %s28, 0
    %s31 = sadd.s32 %s27, %s23
    %p32 = scmp.lt.s32.totalorder %s31, 0
    %s33 = scalar_select %p32, %s31, 0
    %s34 = ssub.s32 %s30, %s33
    %p35 = scmp.eq.s32.totalorder %s34, 0
    %s37 = sadd.s32 %s36, 1
    %s38 = scalar_select %p35, %s36, %s37
    %p41 = pneg %p35
    %p42 = scmp.eq.s32.totalorder %s8, 1
    %p43 = por %p41, %p42
    %p44 = scmp.ne.s32.totalorder %s36, %s39
    %p45 = scmp.eq.s32.totalorder %s8, 0
    %p46 = por %p44, %p45
    %p47 = scmp.ne.s32.totalorder %s36, %s39
    %p48 = scmp.eq.s32.totalorder %s13, 1
    %p49 = por %p47, %p48
    %p50 = scmp.ne.s32.totalorder %s39, %s40
    %p51 = scmp.eq.s32.totalorder %s13, 0
    %p52 = por %p50, %p51
    %p53 = scmp.ne.s32.totalorder %s39, %s40
    %p54 = scmp.eq.s32.totalorder %s14, 1
    %p55 = por %p53, %p54
    %p57 = scmp.ne.s32.totalorder %s40, %s56
    %p58 = scmp.eq.s32.totalorder %s14, 0
    %p59 = por %p57, %p58
    %s60 = sadd.s32 %s15, %s16
    %p61 = scmp.lt.s32.totalorder %s60, 0
    %s62 = scalar_select %p61, %s60, 0
    %s63 = sadd.s32 %s27, %s23
    %p64 = scmp.lt.s32.totalorder %s63, 0
    %s65 = scalar_select %p64, %s63, 0
    %s66 = ssub.s32 %s62, %s65
    %p67 = scmp.eq.s32.totalorder %s66, 0
    %s69 = sadd.s32 %s68, 1
    %s70 = scalar_select %p67, %s68, %s69
    %p73 = pneg %p67
    %p74 = scmp.eq.s32.totalorder %s8, 1
    %p75 = por %p73, %p74
    %p76 = scmp.ne.s32.totalorder %s68, %s71
    %p77 = scmp.eq.s32.totalorder %s8, 0
    %p78 = por %p76, %p77
    %p79 = scmp.ne.s32.totalorder %s68, %s71
    %p80 = scmp.eq.s32.totalorder %s13, 1
    %p81 = por %p79, %p80
    %p82 = scmp.ne.s32.totalorder %s71, %s72
    %p83 = scmp.eq.s32.totalorder %s13, 0
    %p84 = por %p82, %p83
    %p85 = scmp.ne.s32.totalorder %s71, %s72
    %p86 = scmp.eq.s32.totalorder %s14, 1
    %p87 = por %p85, %p86
    %p89 = scmp.ne.s32.totalorder %s72, %s88
    %p90 = scmp.eq.s32.totalorder %s14, 0
    %p91 = por %p89, %p90
    %s92 = ssub.s32 %s15, %s27
    %p93 = scmp.eq.s32.totalorder %s92, 0
    %s95 = sadd.s32 %s94, 1
    %s96 = scalar_select %p93, %s94, %s95
    %p99 = pneg %p93
    %p100 = scmp.eq.s32.totalorder %s8, 1
    %p101 = por %p99, %p100
    %p102 = scmp.ne.s32.totalorder %s94, %s97
    %p103 = scmp.eq.s32.totalorder %s8, 0
    %p104 = por %p102, %p103
    %p105 = scmp.ne.s32.totalorder %s94, %s97
    %p106 = scmp.eq.s32.totalorder %s13, 1
    %p107 = por %p105, %p106
    %p108 = scmp.ne.s32.totalorder %s97, %s98
    %p109 = scmp.eq.s32.totalorder %s13, 0
    %p110 = por %p108, %p109
    %p111 = scmp.ne.s32.totalorder %s97, %s98
    %p112 = scmp.eq.s32.totalorder %s14, 1
    %p113 = por %p111, %p112
    %p115 = scmp.ne.s32.totalorder %s98, %s114
    %p116 = scmp.eq.s32.totalorder %s14, 0
    %p117 = por %p115, %p116
    %p118 = scmp.le.s32.totalorder 1, %s8
    %p119 = scmp.lt.s32.totalorder %s8, 3
    %p120 = pnand %p118, %p119
    %p121 = pneg %p120
    // Predicated region
    $region9: #{decoder_forward.1} parent=5 // pred_check
      _
    $region10: #{decoder_forward.1} parent=5 // pred_check_branch
      %123 = sbr.rel (%p120) target = $region12
    $region11: #{decoder_forward.1} parent=5 // pred_region
      %s124 = ssub.s32 %s8, 1
    $region12: #{decoder_forward.1} parent=5 // pred_fallthru
      _
    %p125 = scmp.lt.s32.totalorder %s8, 2
    // Predicated region
    $region13: #{decoder_forward.1} parent=5 // pred_check
      %p126 = pneg %p125
    $region14: #{decoder_forward.1} parent=5 // pred_check_branch
      %128 = sbr.rel (%p126) target = $region16
    $region15: #{decoder_forward.1} parent=5 // pred_region
      // Predicated region
      $region17: #{decoder_forward.1} parent=15 // pred_check
        %p129 = pneg %p46
      $region18: #{decoder_forward.1} parent=15 // pred_check_branch
        %131 = sbr.rel (%p129) target = $region20
      $region19: #{decoder_forward.1} parent=15 // pred_region
        %s132 = sadd.s32 %s15, %s16
        %p133 = scmp.lt.s32.totalorder %s132, 0
        %s134 = scalar_select %p133, %s132, 0
        %s135 = smul.u32 38, %s134
        %p136 = scmp.lt.s32.totalorder %s135, 37
        %s137 = scalar_select %p136, %s135, 37
        %s138 = smul.addr %s137, 8
        %s139 = scalar_lea.vmem %s0, %s138
        %s140 = sadd.s32 %s15, %s16
        %p141 = scmp.lt.s32.totalorder %s140, 0
        %s142 = scalar_select %p141, %s140, 0
        %s143 = smul.u32 38, %s142
      $region20: #{decoder_forward.1} parent=15 // pred_fallthru
        _
      // Predicated region
      $region21: #{decoder_forward.1} parent=15 // pred_check
        %p144 = pneg %p78
      $region22: #{decoder_forward.1} parent=15 // pred_check_branch
        %146 = sbr.rel (%p144) target = $region24
      $region23: #{decoder_forward.1} parent=15 // pred_region
        %s147 = sadd.s32 %s15, %s16
        %p148 = scmp.lt.s32.totalorder %s147, 0
        %s149 = scalar_select %p148, %s147, 0
        %s150 = smul.u32 38, %s149
        %p151 = scmp.lt.s32.totalorder %s150, 37
        %s152 = scalar_select %p151, %s150, 37
        %s153 = smul.addr %s152, 8
        %s154 = scalar_lea.vmem %s1, %s153
        %s155 = sadd.s32 %s15, %s16
        %p156 = scmp.lt.s32.totalorder %s155, 0
        %s157 = scalar_select %p156, %s155, 0
        %s158 = smul.u32 38, %s157
      $region24: #{decoder_forward.1} parent=15 // pred_fallthru
        _
    $region16: #{decoder_forward.1} parent=5 // pred_fallthru
      _
    %p159 = scmp.le.s32.totalorder 1, %s8
    %p160 = scmp.lt.s32.totalorder %s8, 3
    %p161 = pnand %p159, %p160
    %p162 = pneg %p161
    // Predicated region
    $region25: #{decoder_forward.1} parent=5 // pred_check
      _
    $region26: #{decoder_forward.1} parent=5 // pred_check_branch
      %164 = sbr.rel (%p161) target = $region28
    $region27: #{decoder_forward.1} parent=5 // pred_region
      %s165 = ssub.s32 %s8, 1
      %s166 = sadd.s32 %s17, %s18
      %p167 = scmp.lt.s32.totalorder %s166, 0
      %s168 = scalar_select %p167, %s166, 0
      %s169 = smul.u32 38, %s168
      %p170 = scmp.lt.s32.totalorder %s169, 37
      %s171 = scalar_select %p170, %s169, 37
      %s172 = smul.addr %s171, 8
      %s173 = scalar_lea.vmem %s0, %s172
      %p174 = pneg %p52
      %p175 = pneg %p49
      %s176 = sadd.s32 %s17, %s18
      %p177 = scmp.lt.s32.totalorder %s176, 0
      %s178 = scalar_select %p177, %s176, 0
      %s179 = smul.u32 38, %s178
      %p180 = scmp.lt.s32.totalorder %s179, 37
      %s181 = scalar_select %p180, %s179, 37
      %s182 = smul.addr %s181, 8
      %s183 = scalar_lea.vmem %s1, %s182
      %p184 = pneg %p84
      %p185 = pneg %p81
      %p186 = pneg %p110
      %p187 = pneg %p107
      %p188 = scmp.lt.s32.totalorder %s17, 1
      %s189 = scalar_select %p188, %s17, 1
      %s190 = smul.addr %s189, 8
      %s191 = scalar_lea.vmem %s2, %s190
      %s192 = sadd.s32 %s17, %s18
      %p193 = scmp.lt.s32.totalorder %s192, 0
      %s194 = scalar_select %p193, %s192, 0
      %s195 = smul.u32 38, %s194
      %p196 = scmp.lt.s32.totalorder %s195, 37
      %s197 = scalar_select %p196, %s195, 37
      %s198 = smul.addr %s197, 8
      %s199 = scalar_lea.vmem %s0, %s198
      %s200 = sadd.s32 %s17, %s18
      %p201 = scmp.lt.s32.totalorder %s200, 0
      %s202 = scalar_select %p201, %s200, 0
      %s203 = smul.u32 38, %s202
      %s204 = sadd.s32 %s17, %s18
      %p205 = scmp.lt.s32.totalorder %s204, 0
      %s206 = scalar_select %p205, %s204, 0
      %s207 = smul.u32 38, %s206
      %p208 = scmp.lt.s32.totalorder %s207, 37
      %s209 = scalar_select %p208, %s207, 37
      %s210 = smul.addr %s209, 8
      %s211 = scalar_lea.vmem %s1, %s210
      %s212 = sadd.s32 %s17, %s18
      %p213 = scmp.lt.s32.totalorder %s212, 0
      %s214 = scalar_select %p213, %s212, 0
      %s215 = smul.u32 38, %s214
      %p216 = scmp.lt.s32.totalorder %s17, 1
      %s217 = scalar_select %p216, %s17, 1
      %s218 = smul.addr %s217, 8
      %s219 = scalar_lea.vmem %s2, %s218
      %p220 = scmp.eq.s32.totalorder %s18, 0
      // Predicated region
      $region29: #{decoder_forward.1} parent=27 // pred_check
        %p221 = pneg %p220
      $region30: #{decoder_forward.1} parent=27 // pred_check_branch
        %223 = sbr.rel (%p221) target = $region32
      $region31: #{decoder_forward.1} parent=27 // pred_region
        %vm224 = vcmask 261120
        %225 = vst.msk [vmem:[%s219] sm:$0xff] %vm224, 0.0
      $region32: #{decoder_forward.1} parent=27 // pred_fallthru
        _
      %v226 = vlaneseq
      %v227 = vshrl.u32 %v226, 7
      %v228 = vadd.s32 %v227, 8
      %v229 = vadd.s32 %v227, 16
      %v230 = vadd.s32 %v227, 24
      %v231 = vadd.s32 %v227, 32
      %v232 = vadd.s32 %v227, 40
      %v233 = vadd.s32 %v227, 48
      %v234 = vadd.s32 %v227, 56
      %v235 = vadd.s32 %v227, 64
      %v236 = vadd.s32 %v227, 72
      %v237 = vadd.s32 %v227, 80
      %v238 = vadd.s32 %v227, 88
      %v239 = vadd.s32 %v227, 96
      %v240 = vadd.s32 %v227, 104
      %v241 = vadd.s32 %v227, 112
      %v242 = vadd.s32 %v227, 120
      %v243 = vadd.s32 %v227, 128
      %v244 = vadd.s32 %v227, 136
      %v245 = vadd.s32 %v227, 144
      %v246 = vadd.s32 %v227, 152
      %v247 = vadd.s32 %v227, 160
      %v248 = vadd.s32 %v227, 168
      %v249 = vadd.s32 %v227, 176
      %v250 = vadd.s32 %v227, 184
      %v251 = vadd.s32 %v227, 192
      %v252 = vadd.s32 %v227, 200
      %v253 = vadd.s32 %v227, 208
      %v254 = vadd.s32 %v227, 216
      %v255 = vadd.s32 %v227, 224
      %v256 = vadd.s32 %v227, 232
      %v257 = vadd.s32 %v227, 240
      %v258 = vadd.s32 %v227, 248
      %v259 = vadd.s32 %v227, 256
      %v260 = vadd.s32 %v227, 264
      %v261 = vadd.s32 %v227, 272
      %v262 = vadd.s32 %v227, 280
      %v263 = vadd.s32 %v227, 288
      %v264 = vadd.s32 %v227, 296
      %s265 = sadd.s32 %s17, %s18
      %s266 = smul.u32 %s265, 304
      %v267 = vstv %s266
      %v268 = vadd.s32 %v227, %v267
      %v269 = vadd.s32 %v228, %v267
      %v270 = vadd.s32 %v229, %v267
      %v271 = vadd.s32 %v230, %v267
      %v272 = vadd.s32 %v231, %v267
      %v273 = vadd.s32 %v232, %v267
      %v274 = vadd.s32 %v233, %v267
      %v275 = vadd.s32 %v234, %v267
      %v276 = vadd.s32 %v235, %v267
      %v277 = vadd.s32 %v236, %v267
      %v278 = vadd.s32 %v237, %v267
      %v279 = vadd.s32 %v238, %v267
      %v280 = vadd.s32 %v239, %v267
      %v281 = vadd.s32 %v240, %v267
      %v282 = vadd.s32 %v241, %v267
      %v283 = vadd.s32 %v242, %v267
      %v284 = vadd.s32 %v243, %v267
      %v285 = vadd.s32 %v244, %v267
      %v286 = vadd.s32 %v245, %v267
      %v287 = vadd.s32 %v246, %v267
      %v288 = vadd.s32 %v247, %v267
      %v289 = vadd.s32 %v248, %v267
      %v290 = vadd.s32 %v249, %v267
      %v291 = vadd.s32 %v250, %v267
      %v292 = vadd.s32 %v251, %v267
      %v293 = vadd.s32 %v252, %v267
      %v294 = vadd.s32 %v253, %v267
      %v295 = vadd.s32 %v254, %v267
      %v296 = vadd.s32 %v255, %v267
      %v297 = vadd.s32 %v256, %v267
      %v298 = vadd.s32 %v257, %v267
      %v299 = vadd.s32 %v258, %v267
      %v300 = vadd.s32 %v259, %v267
      %v301 = vadd.s32 %v260, %v267
      %v302 = vadd.s32 %v261, %v267
      %v303 = vadd.s32 %v262, %v267
      %v304 = vadd.s32 %v263, %v267
      %v305 = vadd.s32 %v264, %v267
      %vm306 = vcmp.lt.s32.totalorder %v268, 300
      %vm307 = vcmp.lt.s32.totalorder %v269, 300
      %vm308 = vcmp.lt.s32.totalorder %v270, 300
      %vm309 = vcmp.lt.s32.totalorder %v271, 300
      %vm310 = vcmp.lt.s32.totalorder %v272, 300
      %vm311 = vcmp.lt.s32.totalorder %v273, 300
      %vm312 = vcmp.lt.s32.totalorder %v274, 300
      %vm313 = vcmp.lt.s32.totalorder %v275, 300
      %vm314 = vcmp.lt.s32.totalorder %v276, 300
      %vm315 = vcmp.lt.s32.totalorder %v277, 300
      %vm316 = vcmp.lt.s32.totalorder %v278, 300
      %vm317 = vcmp.lt.s32.totalorder %v279, 300
      %vm318 = vcmp.lt.s32.totalorder %v280, 300
      %vm319 = vcmp.lt.s32.totalorder %v281, 300
      %vm320 = vcmp.lt.s32.totalorder %v282, 300
      %vm321 = vcmp.lt.s32.totalorder %v283, 300
      %vm322 = vcmp.lt.s32.totalorder %v284, 300
      %vm323 = vcmp.lt.s32.totalorder %v285, 300
      %vm324 = vcmp.lt.s32.totalorder %v286, 300
      %vm325 = vcmp.lt.s32.totalorder %v287, 300
      %vm326 = vcmp.lt.s32.totalorder %v288, 300
      %vm327 = vcmp.lt.s32.totalorder %v289, 300
      %vm328 = vcmp.lt.s32.totalorder %v290, 300
      %vm329 = vcmp.lt.s32.totalorder %v291, 300
      %vm330 = vcmp.lt.s32.totalorder %v292, 300
      %vm331 = vcmp.lt.s32.totalorder %v293, 300
      %vm332 = vcmp.lt.s32.totalorder %v294, 300
      %vm333 = vcmp.lt.s32.totalorder %v295, 300
      %vm334 = vcmp.lt.s32.totalorder %v296, 300
      %vm335 = vcmp.lt.s32.totalorder %v297, 300
      %vm336 = vcmp.lt.s32.totalorder %v298, 300
      %vm337 = vcmp.lt.s32.totalorder %v299, 300
      %vm338 = vcmp.lt.s32.totalorder %v300, 300
      %vm339 = vcmp.lt.s32.totalorder %v301, 300
      %vm340 = vcmp.lt.s32.totalorder %v302, 300
      %vm341 = vcmp.lt.s32.totalorder %v303, 300
      %vm342 = vcmp.lt.s32.totalorder %v304, 300
      %vm343 = vcmp.lt.s32.totalorder %v305, 300
      %v344 = vld [vmem:[%s211] sm:$0xff]
      %v345 = vld [vmem:[%s211 + $0x8] sm:$0xff]
      %v346 = vld [vmem:[%s211 + $0x10] sm:$0xff]
      %v347 = vld [vmem:[%s211 + $0x18] sm:$0xff]
      %v348 = vld [vmem:[%s211 + $0x20] sm:$0xff]
      %v349 = vld [vmem:[%s211 + $0x28] sm:$0xff]
      %v350 = vld [vmem:[%s211 + $0x30] sm:$0xff]
      %v351 = vld [vmem:[%s211 + $0x38] sm:$0xff]
      %v352 = vld [vmem:[%s211 + $0x40] sm:$0xff]
      %v353 = vld [vmem:[%s211 + $0x48] sm:$0xff]
      %v354 = vld [vmem:[%s211 + $0x50] sm:$0xff]
      %v355 = vld [vmem:[%s211 + $0x58] sm:$0xff]
      %v356 = vld [vmem:[%s211 + $0x60] sm:$0xff]
      %v357 = vld [vmem:[%s211 + $0x68] sm:$0xff]
      %v358 = vld [vmem:[%s211 + $0x70] sm:$0xff]
      %v359 = vld [vmem:[%s211 + $0x78] sm:$0xff]
      %v360 = vld [vmem:[%s211 + $0x80] sm:$0xff]
      %v361 = vld [vmem:[%s211 + $0x88] sm:$0xff]
      %v362 = vld [vmem:[%s211 + $0x90] sm:$0xff]
      %v363 = vld [vmem:[%s211 + $0x98] sm:$0xff]
      %v364 = vld [vmem:[%s211 + $0xa0] sm:$0xff]
      %v365 = vld [vmem:[%s211 + $0xa8] sm:$0xff]
      %v366 = vld [vmem:[%s211 + $0xb0] sm:$0xff]
      %v367 = vld [vmem:[%s211 + $0xb8] sm:$0xff]
      %v368 = vld [vmem:[%s211 + $0xc0] sm:$0xff]
      %v369 = vld [vmem:[%s211 + $0xc8] sm:$0xff]
      %v370 = vld [vmem:[%s211 + $0xd0] sm:$0xff]
      %v371 = vld [vmem:[%s211 + $0xd8] sm:$0xff]
      %v372 = vld [vmem:[%s211 + $0xe0] sm:$0xff]
      %v373 = vld [vmem:[%s211 + $0xe8] sm:$0xff]
      %v374 = vld [vmem:[%s211 + $0xf0] sm:$0xff]
      %v375 = vld [vmem:[%s211 + $0xf8] sm:$0xff]
      %v376 = vld [vmem:[%s211 + $0x100] sm:$0xff]
      %v377 = vld [vmem:[%s211 + $0x108] sm:$0xff]
      %v378 = vld [vmem:[%s211 + $0x110] sm:$0xff]
      %v379 = vld [vmem:[%s211 + $0x118] sm:$0xff]
      %v380 = vld [vmem:[%s211 + $0x120] sm:$0xff]
      %v381 = vld [vmem:[%s211 + $0x128] sm:$0xff]
      %v382 = vsel %vm306, 1, 0
      %v383 = vsel %vm307, 1, 0
      %v384 = vsel %vm308, 1, 0
      %v385 = vsel %vm309, 1, 0
      %v386 = vsel %vm310, 1, 0
      %v387 = vsel %vm311, 1, 0
      %v388 = vsel %vm312, 1, 0
      %v389 = vsel %vm313, 1, 0
      %v390 = vsel %vm314, 1, 0
      %v391 = vsel %vm315, 1, 0
      %v392 = vsel %vm316, 1, 0
      %v393 = vsel %vm317, 1, 0
      %v394 = vsel %vm318, 1, 0
      %v395 = vsel %vm319, 1, 0
      %v396 = vsel %vm320, 1, 0
      %v397 = vsel %vm321, 1, 0
      %v398 = vsel %vm322, 1, 0
      %v399 = vsel %vm323, 1, 0
      %v400 = vsel %vm324, 1, 0
      %v401 = vsel %vm325, 1, 0
      %v402 = vsel %vm326, 1, 0
      %v403 = vsel %vm327, 1, 0
      %v404 = vsel %vm328, 1, 0
      %v405 = vsel %vm329, 1, 0
      %v406 = vsel %vm330, 1, 0
      %v407 = vsel %vm331, 1, 0
      %v408 = vsel %vm332, 1, 0
      %v409 = vsel %vm333, 1, 0
      %v410 = vsel %vm334, 1, 0
      %v411 = vsel %vm335, 1, 0
      %v412 = vsel %vm336, 1, 0
      %v413 = vsel %vm337, 1, 0
      %v414 = vsel %vm338, 1, 0
      %v415 = vsel %vm339, 1, 0
      %v416 = vsel %vm340, 1, 0
      %v417 = vsel %vm341, 1, 0
      %v418 = vsel %vm342, 1, 0
      %v419 = vsel %vm343, 1, 0
      %vm420 = vcmp.eq.s32.totalorder %v382, 1
      %vm421 = vcmp.eq.s32.totalorder %v383, 1
      %vm422 = vcmp.eq.s32.totalorder %v384, 1
      %vm423 = vcmp.eq.s32.totalorder %v385, 1
      %vm424 = vcmp.eq.s32.totalorder %v386, 1
      %vm425 = vcmp.eq.s32.totalorder %v387, 1
      %vm426 = vcmp.eq.s32.totalorder %v388, 1
      %vm427 = vcmp.eq.s32.totalorder %v389, 1
      %vm428 = vcmp.eq.s32.totalorder %v390, 1
      %vm429 = vcmp.eq.s32.totalorder %v391, 1
      %vm430 = vcmp.eq.s32.totalorder %v392, 1
      %vm431 = vcmp.eq.s32.totalorder %v393, 1
      %vm432 = vcmp.eq.s32.totalorder %v394, 1
      %vm433 = vcmp.eq.s32.totalorder %v395, 1
      %vm434 = vcmp.eq.s32.totalorder %v396, 1
      %vm435 = vcmp.eq.s32.totalorder %v397, 1
      %vm436 = vcmp.eq.s32.totalorder %v398, 1
      %vm437 = vcmp.eq.s32.totalorder %v399, 1
      %vm438 = vcmp.eq.s32.totalorder %v400, 1
      %vm439 = vcmp.eq.s32.totalorder %v401, 1
      %vm440 = vcmp.eq.s32.totalorder %v402, 1
      %vm441 = vcmp.eq.s32.totalorder %v403, 1
      %vm442 = vcmp.eq.s32.totalorder %v404, 1
      %vm443 = vcmp.eq.s32.totalorder %v405, 1
      %vm444 = vcmp.eq.s32.totalorder %v406, 1
      %vm445 = vcmp.eq.s32.totalorder %v407, 1
      %vm446 = vcmp.eq.s32.totalorder %v408, 1
      %vm447 = vcmp.eq.s32.totalorder %v409, 1
      %vm448 = vcmp.eq.s32.totalorder %v410, 1
      %vm449 = vcmp.eq.s32.totalorder %v411, 1
      %vm450 = vcmp.eq.s32.totalorder %v412, 1
      %vm451 = vcmp.eq.s32.totalorder %v413, 1
      %vm452 = vcmp.eq.s32.totalorder %v414, 1
      %vm453 = vcmp.eq.s32.totalorder %v415, 1
      %vm454 = vcmp.eq.s32.totalorder %v416, 1
      %vm455 = vcmp.eq.s32.totalorder %v417, 1
      %vm456 = vcmp.eq.s32.totalorder %v418, 1
      %vm457 = vcmp.eq.s32.totalorder %v419, 1
      %v458 = vsel %vm420, %v344, 0.0
      %v459 = vsel %vm421, %v345, 0.0
      %v460 = vsel %vm422, %v346, 0.0
      %v461 = vsel %vm423, %v347, 0.0
      %v462 = vsel %vm424, %v348, 0.0
      %v463 = vsel %vm425, %v349, 0.0
      %v464 = vsel %vm426, %v350, 0.0
      %v465 = vsel %vm427, %v351, 0.0
      %v466 = vsel %vm428, %v352, 0.0
      %v467 = vsel %vm429, %v353, 0.0
      %v468 = vsel %vm430, %v354, 0.0
      %v469 = vsel %vm431, %v355, 0.0
      %v470 = vsel %vm432, %v356, 0.0
      %v471 = vsel %vm433, %v357, 0.0
      %v472 = vsel %vm434, %v358, 0.0
      %v473 = vsel %vm435, %v359, 0.0
      %v474 = vsel %vm436, %v360, 0.0
      %v475 = vsel %vm437, %v361, 0.0
      %v476 = vsel %vm438, %v362, 0.0
      %v477 = vsel %vm439, %v363, 0.0
      %v478 = vsel %vm440, %v364, 0.0
      %v479 = vsel %vm441, %v365, 0.0
      %v480 = vsel %vm442, %v366, 0.0
      %v481 = vsel %vm443, %v367, 0.0
      %v482 = vsel %vm444, %v368, 0.0
      %v483 = vsel %vm445, %v369, 0.0
      %v484 = vsel %vm446, %v370, 0.0
      %v485 = vsel %vm447, %v371, 0.0
      %v486 = vsel %vm448, %v372, 0.0
      %v487 = vsel %vm449, %v373, 0.0
      %v488 = vsel %vm450, %v374, 0.0
      %v489 = vsel %vm451, %v375, 0.0
      %v490 = vsel %vm452, %v376, 0.0
      %v491 = vsel %vm453, %v377, 0.0
      %v492 = vsel %vm454, %v378, 0.0
      %v493 = vsel %vm455, %v379, 0.0
      %v494 = vsel %vm456, %v380, 0.0
      %v495 = vsel %vm457, %v381, 0.0
      %v496 = vlaneseq
      %v497 = vand.u32 %v496, 127
      %v498 = vld [vmem:[%s199] sm:$0xff]
      %v499 = vld [vmem:[%s199 + $0x8] sm:$0xff]
      %v500 = vld [vmem:[%s199 + $0x10] sm:$0xff]
      %v501 = vld [vmem:[%s199 + $0x18] sm:$0xff]
      %v502 = vld [vmem:[%s199 + $0x20] sm:$0xff]
      %v503 = vld [vmem:[%s199 + $0x28] sm:$0xff]
      %v504 = vld [vmem:[%s199 + $0x30] sm:$0xff]
      %v505 = vld [vmem:[%s199 + $0x38] sm:$0xff]
      %v506 = vld [vmem:[%s199 + $0x40] sm:$0xff]
      %v507 = vld [vmem:[%s199 + $0x48] sm:$0xff]
      %v508 = vld [vmem:[%s199 + $0x50] sm:$0xff]
      %v509 = vld [vmem:[%s199 + $0x58] sm:$0xff]
      %v510 = vld [vmem:[%s199 + $0x60] sm:$0xff]
      %v511 = vld [vmem:[%s199 + $0x68] sm:$0xff]
      %v512 = vld [vmem:[%s199 + $0x70] sm:$0xff]
      %v513 = vld [vmem:[%s199 + $0x78] sm:$0xff]
      %v514 = vld [vmem:[%s199 + $0x80] sm:$0xff]
      %v515 = vld [vmem:[%s199 + $0x88] sm:$0xff]
      %v516 = vld [vmem:[%s199 + $0x90] sm:$0xff]
      %v517 = vld [vmem:[%s199 + $0x98] sm:$0xff]
      %v518 = vld [vmem:[%s199 + $0xa0] sm:$0xff]
      %v519 = vld [vmem:[%s199 + $0xa8] sm:$0xff]
      %v520 = vld [vmem:[%s199 + $0xb0] sm:$0xff]
      %v521 = vld [vmem:[%s199 + $0xb8] sm:$0xff]
      %v522 = vld [vmem:[%s199 + $0xc0] sm:$0xff]
      %v523 = vld [vmem:[%s199 + $0xc8] sm:$0xff]
      %v524 = vld [vmem:[%s199 + $0xd0] sm:$0xff]
      %v525 = vld [vmem:[%s199 + $0xd8] sm:$0xff]
      %v526 = vld [vmem:[%s199 + $0xe0] sm:$0xff]
      %v527 = vld [vmem:[%s199 + $0xe8] sm:$0xff]
      %v528 = vld [vmem:[%s199 + $0xf0] sm:$0xff]
      %v529 = vld [vmem:[%s199 + $0xf8] sm:$0xff]
      %v530 = vld [vmem:[%s199 + $0x100] sm:$0xff]
      %v531 = vld [vmem:[%s199 + $0x108] sm:$0xff]
      %v532 = vld [vmem:[%s199 + $0x110] sm:$0xff]
      %v533 = vld [vmem:[%s199 + $0x118] sm:$0xff]
      %v534 = vld [vmem:[%s199 + $0x120] sm:$0xff]
      %v535 = vld [vmem:[%s199 + $0x128] sm:$0xff]
      %536 = vset.pattern.permute.xlu0 0
      %537 = vperm.xlu0 %536, %v498
      %v538 = vpop.permute.xlu0 %537
      %539 = vset.pattern.permute.xlu0 0
      %540 = vperm.xlu0 %539, %v499
      %v541 = vpop.permute.xlu0 %540
      %542 = vset.pattern.permute.xlu0 0
      %543 = vperm.xlu0 %542, %v500
      %v544 = vpop.permute.xlu0 %543
      %545 = vset.pattern.permute.xlu0 0
      %546 = vperm.xlu0 %545, %v501
      %v547 = vpop.permute.xlu0 %546
      %548 = vset.pattern.permute.xlu0 0
      %549 = vperm.xlu0 %548, %v502
      %v550 = vpop.permute.xlu0 %549
      %551 = vset.pattern.permute.xlu0 0
      %552 = vperm.xlu0 %551, %v503
      %v553 = vpop.permute.xlu0 %552
      %554 = vset.pattern.permute.xlu0 0
      %555 = vperm.xlu0 %554, %v504
      %v556 = vpop.permute.xlu0 %555
      %557 = vset.pattern.permute.xlu0 0
      %558 = vperm.xlu0 %557, %v505
      %v559 = vpop.permute.xlu0 %558
      %560 = vset.pattern.permute.xlu0 0
      %561 = vperm.xlu0 %560, %v506
      %v562 = vpop.permute.xlu0 %561
      %563 = vset.pattern.permute.xlu0 0
      %564 = vperm.xlu0 %563, %v507
      %v565 = vpop.permute.xlu0 %564
      %566 = vset.pattern.permute.xlu0 0
      %567 = vperm.xlu0 %566, %v508
      %v568 = vpop.permute.xlu0 %567
      %569 = vset.pattern.permute.xlu0 0
      %570 = vperm.xlu0 %569, %v509
      %v571 = vpop.permute.xlu0 %570
      %572 = vset.pattern.permute.xlu0 0
      %573 = vperm.xlu0 %572, %v510
      %v574 = vpop.permute.xlu0 %573
      %575 = vset.pattern.permute.xlu0 0
      %576 = vperm.xlu0 %575, %v511
      %v577 = vpop.permute.xlu0 %576
      %578 = vset.pattern.permute.xlu0 0
      %579 = vperm.xlu0 %578, %v512
      %v580 = vpop.permute.xlu0 %579
      %581 = vset.pattern.permute.xlu0 0
      %582 = vperm.xlu0 %581, %v513
      %v583 = vpop.permute.xlu0 %582
      %584 = vset.pattern.permute.xlu0 0
      %585 = vperm.xlu0 %584, %v514
      %v586 = vpop.permute.xlu0 %585
      %587 = vset.pattern.permute.xlu0 0
      %588 = vperm.xlu0 %587, %v515
      %v589 = vpop.permute.xlu0 %588
      %590 = vset.pattern.permute.xlu0 0
      %591 = vperm.xlu0 %590, %v516
      %v592 = vpop.permute.xlu0 %591
      %593 = vset.pattern.permute.xlu0 0
      %594 = vperm.xlu0 %593, %v517
      %v595 = vpop.permute.xlu0 %594
      %596 = vset.pattern.permute.xlu0 0
      %597 = vperm.xlu0 %596, %v518
      %v598 = vpop.permute.xlu0 %597
      %599 = vset.pattern.permute.xlu0 0
      %600 = vperm.xlu0 %599, %v519
      %v601 = vpop.permute.xlu0 %600
      %602 = vset.pattern.permute.xlu0 0
      %603 = vperm.xlu0 %602, %v520
      %v604 = vpop.permute.xlu0 %603
      %605 = vset.pattern.permute.xlu0 0
      %606 = vperm.xlu0 %605, %v521
      %v607 = vpop.permute.xlu0 %606
      %608 = vset.pattern.permute.xlu0 0
      %609 = vperm.xlu0 %608, %v522
      %v610 = vpop.permute.xlu0 %609
      %611 = vset.pattern.permute.xlu0 0
      %612 = vperm.xlu0 %611, %v523
      %v613 = vpop.permute.xlu0 %612
      %614 = vset.pattern.permute.xlu0 0
      %615 = vperm.xlu0 %614, %v524
      %v616 = vpop.permute.xlu0 %615
      %617 = vset.pattern.permute.xlu0 0
      %618 = vperm.xlu0 %617, %v525
      %v619 = vpop.permute.xlu0 %618
      %620 = vset.pattern.permute.xlu0 0
      %621 = vperm.xlu0 %620, %v526
      %v622 = vpop.permute.xlu0 %621
      %623 = vset.pattern.permute.xlu0 0
      %624 = vperm.xlu0 %623, %v527
      %v625 = vpop.permute.xlu0 %624
      %626 = vset.pattern.permute.xlu0 0
      %627 = vperm.xlu0 %626, %v528
      %v628 = vpop.permute.xlu0 %627
      %629 = vset.pattern.permute.xlu0 0
      %630 = vperm.xlu0 %629, %v529
      %v631 = vpop.permute.xlu0 %630
      %632 = vset.pattern.permute.xlu0 0
      %633 = vperm.xlu0 %632, %v530
      %v634 = vpop.permute.xlu0 %633
      %635 = vset.pattern.permute.xlu0 0
      %636 = vperm.xlu0 %635, %v531
      %v637 = vpop.permute.xlu0 %636
      %638 = vset.pattern.permute.xlu0 0
      %639 = vperm.xlu0 %638, %v532
      %v640 = vpop.permute.xlu0 %639
      %641 = vset.pattern.permute.xlu0 0
      %642 = vperm.xlu0 %641, %v533
      %v643 = vpop.permute.xlu0 %642
      %644 = vset.pattern.permute.xlu0 0
      %645 = vperm.xlu0 %644, %v534
      %v646 = vpop.permute.xlu0 %645
      %647 = vset.pattern.permute.xlu0 0
      %648 = vperm.xlu0 %647, %v535
      %v649 = vpop.permute.xlu0 %648
      %vm650 = vcmp.eq.s32.totalorder %v497, %v538
      %vm651 = vcmp.eq.s32.totalorder %v497, %v541
      %vm652 = vcmp.eq.s32.totalorder %v497, %v544
      %vm653 = vcmp.eq.s32.totalorder %v497, %v547
      %vm654 = vcmp.eq.s32.totalorder %v497, %v550
      %vm655 = vcmp.eq.s32.totalorder %v497, %v553
      %vm656 = vcmp.eq.s32.totalorder %v497, %v556
      %vm657 = vcmp.eq.s32.totalorder %v497, %v559
      %vm658 = vcmp.eq.s32.totalorder %v497, %v562
      %vm659 = vcmp.eq.s32.totalorder %v497, %v565
      %vm660 = vcmp.eq.s32.totalorder %v497, %v568
      %vm661 = vcmp.eq.s32.totalorder %v497, %v571
      %vm662 = vcmp.eq.s32.totalorder %v497, %v574
      %vm663 = vcmp.eq.s32.totalorder %v497, %v577
      %vm664 = vcmp.eq.s32.totalorder %v497, %v580
      %vm665 = vcmp.eq.s32.totalorder %v497, %v583
      %vm666 = vcmp.eq.s32.totalorder %v497, %v586
      %vm667 = vcmp.eq.s32.totalorder %v497, %v589
      %vm668 = vcmp.eq.s32.totalorder %v497, %v592
      %vm669 = vcmp.eq.s32.totalorder %v497, %v595
      %vm670 = vcmp.eq.s32.totalorder %v497, %v598
      %vm671 = vcmp.eq.s32.totalorder %v497, %v601
      %vm672 = vcmp.eq.s32.totalorder %v497, %v604
      %vm673 = vcmp.eq.s32.totalorder %v497, %v607
      %vm674 = vcmp.eq.s32.totalorder %v497, %v610
      %vm675 = vcmp.eq.s32.totalorder %v497, %v613
      %vm676 = vcmp.eq.s32.totalorder %v497, %v616
      %vm677 = vcmp.eq.s32.totalorder %v497, %v619
      %vm678 = vcmp.eq.s32.totalorder %v497, %v622
      %vm679 = vcmp.eq.s32.totalorder %v497, %v625
      %vm680 = vcmp.eq.s32.totalorder %v497, %v628
      %vm681 = vcmp.eq.s32.totalorder %v497, %v631
      %vm682 = vcmp.eq.s32.totalorder %v497, %v634
      %vm683 = vcmp.eq.s32.totalorder %v497, %v637
      %vm684 = vcmp.eq.s32.totalorder %v497, %v640
      %vm685 = vcmp.eq.s32.totalorder %v497, %v643
      %vm686 = vcmp.eq.s32.totalorder %v497, %v646
      %vm687 = vcmp.eq.s32.totalorder %v497, %v649
      %vm688 = vmand %vm650, %vm420
      %vm689 = vmand %vm651, %vm421
      %vm690 = vmand %vm652, %vm422
      %vm691 = vmand %vm653, %vm423
      %vm692 = vmand %vm654, %vm424
      %vm693 = vmand %vm655, %vm425
      %vm694 = vmand %vm656, %vm426
      %vm695 = vmand %vm657, %vm427
      %vm696 = vmand %vm658, %vm428
      %vm697 = vmand %vm659, %vm429
      %vm698 = vmand %vm660, %vm430
      %vm699 = vmand %vm661, %vm431
      %vm700 = vmand %vm662, %vm432
      %vm701 = vmand %vm663, %vm433
      %vm702 = vmand %vm664, %vm434
      %vm703 = vmand %vm665, %vm435
      %vm704 = vmand %vm666, %vm436
      %vm705 = vmand %vm667, %vm437
      %vm706 = vmand %vm668, %vm438
      %vm707 = vmand %vm669, %vm439
      %vm708 = vmand %vm670, %vm440
      %vm709 = vmand %vm671, %vm441
      %vm710 = vmand %vm672, %vm442
      %vm711 = vmand %vm673, %vm443
      %vm712 = vmand %vm674, %vm444
      %vm713 = vmand %vm675, %vm445
      %vm714 = vmand %vm676, %vm446
      %vm715 = vmand %vm677, %vm447
      %vm716 = vmand %vm678, %vm448
      %vm717 = vmand %vm679, %vm449
      %vm718 = vmand %vm680, %vm450
      %vm719 = vmand %vm681, %vm451
      %vm720 = vmand %vm682, %vm452
      %vm721 = vmand %vm683, %vm453
      %vm722 = vmand %vm684, %vm454
      %vm723 = vmand %vm685, %vm455
      %vm724 = vmand %vm686, %vm456
      %vm725 = vmand %vm687, %vm457
      %v726 = vsel %vm688, 1, 0
      %v727 = vsel %vm689, 1, 0
      %v728 = vsel %vm690, 1, 0
      %v729 = vsel %vm691, 1, 0
      %v730 = vsel %vm692, 1, 0
      %v731 = vsel %vm693, 1, 0
      %v732 = vsel %vm694, 1, 0
      %v733 = vsel %vm695, 1, 0
      %v734 = vsel %vm696, 1, 0
      %v735 = vsel %vm697, 1, 0
      %v736 = vsel %vm698, 1, 0
      %v737 = vsel %vm699, 1, 0
      %v738 = vsel %vm700, 1, 0
      %v739 = vsel %vm701, 1, 0
      %v740 = vsel %vm702, 1, 0
      %v741 = vsel %vm703, 1, 0
      %v742 = vsel %vm704, 1, 0
      %v743 = vsel %vm705, 1, 0
      %v744 = vsel %vm706, 1, 0
      %v745 = vsel %vm707, 1, 0
      %v746 = vsel %vm708, 1, 0
      %v747 = vsel %vm709, 1, 0
      %v748 = vsel %vm710, 1, 0
      %v749 = vsel %vm711, 1, 0
      %v750 = vsel %vm712, 1, 0
      %v751 = vsel %vm713, 1, 0
      %v752 = vsel %vm714, 1, 0
      %v753 = vsel %vm715, 1, 0
      %v754 = vsel %vm716, 1, 0
      %v755 = vsel %vm717, 1, 0
      %v756 = vsel %vm718, 1, 0
      %v757 = vsel %vm719, 1, 0
      %v758 = vsel %vm720, 1, 0
      %v759 = vsel %vm721, 1, 0
      %v760 = vsel %vm722, 1, 0
      %v761 = vsel %vm723, 1, 0
      %v762 = vsel %vm724, 1, 0
      %v763 = vsel %vm725, 1, 0
      %v764 = vcvt.s32.f32 %v726
      %v765 = vcvt.s32.f32 %v727
      %v766 = vcvt.s32.f32 %v728
      %v767 = vcvt.s32.f32 %v729
      %v768 = vcvt.s32.f32 %v730
      %v769 = vcvt.s32.f32 %v731
      %v770 = vcvt.s32.f32 %v732
      %v771 = vcvt.s32.f32 %v733
      %v772 = vcvt.s32.f32 %v734
      %v773 = vcvt.s32.f32 %v735
      %v774 = vcvt.s32.f32 %v736
      %v775 = vcvt.s32.f32 %v737
      %v776 = vcvt.s32.f32 %v738
      %v777 = vcvt.s32.f32 %v739
      %v778 = vcvt.s32.f32 %v740
      %v779 = vcvt.s32.f32 %v741
      %v780 = vcvt.s32.f32 %v742
      %v781 = vcvt.s32.f32 %v743
      %v782 = vcvt.s32.f32 %v744
      %v783 = vcvt.s32.f32 %v745
      %v784 = vcvt.s32.f32 %v746
      %v785 = vcvt.s32.f32 %v747
      %v786 = vcvt.s32.f32 %v748
      %v787 = vcvt.s32.f32 %v749
      %v788 = vcvt.s32.f32 %v750
      %v789 = vcvt.s32.f32 %v751
      %v790 = vcvt.s32.f32 %v752
      %v791 = vcvt.s32.f32 %v753
      %v792 = vcvt.s32.f32 %v754
      %v793 = vcvt.s32.f32 %v755
      %v794 = vcvt.s32.f32 %v756
      %v795 = vcvt.s32.f32 %v757
      %v796 = vcvt.s32.f32 %v758
      %v797 = vcvt.s32.f32 %v759
      %v798 = vcvt.s32.f32 %v760
      %v799 = vcvt.s32.f32 %v761
      %v800 = vcvt.s32.f32 %v762
      %v801 = vcvt.s32.f32 %v763
      %802 = vxpose.xlu0.b32.start [1/16] %v764, 128
      %803 = vxpose.xlu0.b32.cont [2/16] %v765, 128
      %804 = vxpose.xlu0.b32.cont [3/16] %v766, 128
      %805 = vxpose.xlu0.b32.cont [4/16] %v767, 128
      %806 = vxpose.xlu0.b32.cont [5/16] %v768, 128
      %807 = vxpose.xlu0.b32.cont [6/16] %v769, 128
      %808 = vxpose.xlu0.b32.cont [7/16] %v770, 128
      %809 = vxpose.xlu0.b32.cont [8/16] %v771, 128
      %810 = vxpose.xlu0.b32.cont [9/16] %v772, 128
      %811 = vxpose.xlu0.b32.cont [10/16] %v773, 128
      %812 = vxpose.xlu0.b32.cont [11/16] %v774, 128
      %813 = vxpose.xlu0.b32.cont [12/16] %v775, 128
      %814 = vxpose.xlu0.b32.cont [13/16] %v776, 128
      %815 = vxpose.xlu0.b32.cont [14/16] %v777, 128
      %816 = vxpose.xlu0.b32.cont [15/16] %v778, 128
      %817 = vxpose.xlu0.b32.end [16/16] %v779, 128
      %v818 = vpop.trf.xlu0
      %v819 = vpop.trf.xlu0
      %v820 = vpop.trf.xlu0
      %v821 = vpop.trf.xlu0
      %v822 = vpop.trf.xlu0
      %v823 = vpop.trf.xlu0
      %v824 = vpop.trf.xlu0
      %v825 = vpop.trf.xlu0
      %v826 = vpop.trf.xlu0
      %v827 = vpop.trf.xlu0
      %v828 = vpop.trf.xlu0
      %v829 = vpop.trf.xlu0
      %v830 = vpop.trf.xlu0
      %v831 = vpop.trf.xlu0
      %v832 = vpop.trf.xlu0
      %v833 = vpop.trf.xlu0
      %834 = vxpose.xlu0.b32.start [1/16] %v780, 128
      %835 = vxpose.xlu0.b32.cont [2/16] %v781, 128
      %836 = vxpose.xlu0.b32.cont [3/16] %v782, 128
      %837 = vxpose.xlu0.b32.cont [4/16] %v783, 128
      %838 = vxpose.xlu0.b32.cont [5/16] %v784, 128
      %839 = vxpose.xlu0.b32.cont [6/16] %v785, 128
      %840 = vxpose.xlu0.b32.cont [7/16] %v786, 128
      %841 = vxpose.xlu0.b32.cont [8/16] %v787, 128
      %842 = vxpose.xlu0.b32.cont [9/16] %v788, 128
      %843 = vxpose.xlu0.b32.cont [10/16] %v789, 128
      %844 = vxpose.xlu0.b32.cont [11/16] %v790, 128
      %845 = vxpose.xlu0.b32.cont [12/16] %v791, 128
      %846 = vxpose.xlu0.b32.cont [13/16] %v792, 128
      %847 = vxpose.xlu0.b32.cont [14/16] %v793, 128
      %848 = vxpose.xlu0.b32.cont [15/16] %v794, 128
      %849 = vxpose.xlu0.b32.end [16/16] %v795, 128
      %v850 = vpop.trf.xlu0
      %v851 = vpop.trf.xlu0
      %v852 = vpop.trf.xlu0
      %v853 = vpop.trf.xlu0
      %v854 = vpop.trf.xlu0
      %v855 = vpop.trf.xlu0
      %v856 = vpop.trf.xlu0
      %v857 = vpop.trf.xlu0
      %v858 = vpop.trf.xlu0
      %v859 = vpop.trf.xlu0
      %v860 = vpop.trf.xlu0
      %v861 = vpop.trf.xlu0
      %v862 = vpop.trf.xlu0
      %v863 = vpop.trf.xlu0
      %v864 = vpop.trf.xlu0
      %v865 = vpop.trf.xlu0
      %866 = vxpose.xlu0.b32.start [1/16] %v796, 128
      %867 = vxpose.xlu0.b32.cont [2/16] %v797, 128
      %868 = vxpose.xlu0.b32.cont [3/16] %v798, 128
      %869 = vxpose.xlu0.b32.cont [4/16] %v799, 128
      %870 = vxpose.xlu0.b32.cont [5/16] %v800, 128
      %871 = vxpose.xlu0.b32.cont [6/16] %v801, 128
      %872 = vxpose.xlu0.b32.cont [7/16] 0.0, 128
      %873 = vxpose.xlu0.b32.cont [8/16] 0.0, 128
      %874 = vxpose.xlu0.b32.cont [9/16] 0.0, 128
      %875 = vxpose.xlu0.b32.cont [10/16] 0.0, 128
      %876 = vxpose.xlu0.b32.cont [11/16] 0.0, 128
      %877 = vxpose.xlu0.b32.cont [12/16] 0.0, 128
      %878 = vxpose.xlu0.b32.cont [13/16] 0.0, 128
      %879 = vxpose.xlu0.b32.cont [14/16] 0.0, 128
      %880 = vxpose.xlu0.b32.cont [15/16] 0.0, 128
      %881 = vxpose.xlu0.b32.end [16/16] 0.0, 128
      %v882 = vpop.trf.xlu0
      %v883 = vpop.trf.xlu0
      %v884 = vpop.trf.xlu0
      %v885 = vpop.trf.xlu0
      %v886 = vpop.trf.xlu0
      %v887 = vpop.trf.xlu0
      %v888 = vpop.trf.xlu0
      %v889 = vpop.trf.xlu0
      %v890 = vpop.trf.xlu0
      %v891 = vpop.trf.xlu0
      %v892 = vpop.trf.xlu0
      %v893 = vpop.trf.xlu0
      %v894 = vpop.trf.xlu0
      %v895 = vpop.trf.xlu0
      %v896 = vpop.trf.xlu0
      %v897 = vpop.trf.xlu0
      %vm898 = vcmask 392192
      %v900 = vsel %vm898, %v882, 0
      %902 = vmatprep.subr.mxu0 0.0
      %903 = vmatpush1.msra.mxu0 %v458
      %904 = vmatprep.subr.mxu0 0.0
      %905 = vmatpush1.msra.mxu0 %v459
      %906 = vmatprep.subr.mxu0 0.0
      %907 = vmatpush1.msra.mxu0 %v460
      %908 = vmatprep.subr.mxu0 0.0
      %909 = vmatpush1.msra.mxu0 %v461
      %910 = vmatprep.subr.mxu0 0.0
      %911 = vmatpush1.msra.mxu0 %v462
      %912 = vmatprep.subr.mxu0 0.0
      %913 = vmatpush1.msra.mxu0 %v463
      %914 = vmatprep.subr.mxu0 0.0
      %915 = vmatpush1.msra.mxu0 %v464
      %916 = vmatprep.subr.mxu0 0.0
      %917 = vmatpush1.msra.mxu0 %v465
      %918 = vmatprep.subr.mxu0 0.0
      %919 = vmatpush1.msra.mxu0 %v466
      %920 = vmatprep.subr.mxu0 0.0
      %921 = vmatpush1.msra.mxu0 %v467
      %922 = vmatprep.subr.mxu0 0.0
      %923 = vmatpush1.msra.mxu0 %v468
      %924 = vmatprep.subr.mxu0 0.0
      %925 = vmatpush1.msra.mxu0 %v469
      %926 = vmatprep.subr.mxu0 0.0
      %927 = vmatpush1.msra.mxu0 %v470
      %928 = vmatprep.subr.mxu0 0.0
      %929 = vmatpush1.msra.mxu0 %v471
      %930 = vmatprep.subr.mxu0 0.0
      %931 = vmatpush1.msra.mxu0 %v472
      %932 = vmatprep.subr.mxu0 0.0
      %933 = vmatpush1.msra.mxu0 %v473
      %934 = vmatprep.subr.mxu0 0.0
      %935 = vmatpush1.msra.mxu0 %v474
      %936 = vmatprep.subr.mxu0 0.0
      %937 = vmatpush1.msra.mxu0 %v475
      %938 = vmatprep.subr.mxu0 0.0
      %939 = vmatpush1.msra.mxu0 %v476
      %940 = vmatprep.subr.mxu0 0.0
      %941 = vmatpush1.msra.mxu0 %v477
      %942 = vmatprep.subr.mxu0 0.0
      %943 = vmatpush1.msra.mxu0 %v478
      %944 = vmatprep.subr.mxu0 0.0
      %945 = vmatpush1.msra.mxu0 %v479
      %946 = vmatprep.subr.mxu0 0.0
      %947 = vmatpush1.msra.mxu0 %v480
      %948 = vmatprep.subr.mxu0 0.0
      %949 = vmatpush1.msra.mxu0 %v481
      %950 = vmatprep.subr.mxu0 0.0
      %951 = vmatpush1.msra.mxu0 %v482
      %952 = vmatprep.subr.mxu0 0.0
      %953 = vmatpush1.msra.mxu0 %v483
      %954 = vmatprep.subr.mxu0 0.0
      %955 = vmatpush1.msra.mxu0 %v484
      %956 = vmatprep.subr.mxu0 0.0
      %957 = vmatpush1.msra.mxu0 %v485
      %958 = vmatprep.subr.mxu0 0.0
      %959 = vmatpush1.msra.mxu0 %v486
      %960 = vmatprep.subr.mxu0 0.0
      %961 = vmatpush1.msra.mxu0 %v487
      %962 = vmatprep.subr.mxu0 0.0
      %963 = vmatpush1.msra.mxu0 %v488
      %964 = vmatprep.subr.mxu0 0.0
      %965 = vmatpush1.msra.mxu0 %v489
      %966 = vmatprep.mubr.f32.mxu0 %v850
      %967 = vmatmul.mubr.f32.gmra.mrb[0].mxu0 %v818
      %v968 = vpop.f32.mrb[0].mxu0
      %v969 = vadd.f32 0.0, %v968
      %v970 = vpop.f32.mrb[0].mxu0
      %971 = vdwg.mxu0
      %972 = vmatprep.subr.mxu0 0.0
      %973 = vmatpush1.msra.mxu0 %v490
      %974 = vmatprep.subr.mxu0 0.0
      %975 = vmatpush1.msra.mxu0 %v491
      %976 = vmatprep.subr.mxu0 0.0
      %977 = vmatpush1.msra.mxu0 %v492
      %978 = vmatprep.subr.mxu0 0.0
      %979 = vmatpush1.msra.mxu0 %v493
      %980 = vmatprep.subr.mxu0 0.0
      %981 = vmatpush1.msra.mxu0 %v494
      %982 = vmatprep.subr.mxu0 0.0
      %983 = vmatpush1.msra.mxu0 %v495
      %984 = vmatprep.subr.mxu0 0.0
      %985 = vmatpush1.msra.mxu0 0.0
      %986 = vmatprep.subr.mxu0 0.0
      %987 = vmatpush1.msra.mxu0 0.0
      %988 = vmatprep.subr.mxu0 0.0
      %989 = vmatpush1.msra.mxu0 0.0
      %990 = vmatprep.subr.mxu0 0.0
      %991 = vmatpush1.msra.mxu0 0.0
      %992 = vmatprep.subr.mxu0 0.0
      %993 = vmatpush1.msra.mxu0 0.0
      %994 = vmatprep.subr.mxu0 0.0
      %995 = vmatpush1.msra.mxu0 0.0
      %996 = vmatprep.subr.mxu0 0.0
      %997 = vmatpush1.msra.mxu0 0.0
      %998 = vmatprep.subr.mxu0 0.0
      %999 = vmatpush1.msra.mxu0 0.0
      %1000 = vmatprep.subr.mxu0 0.0
      %1001 = vmatpush1.msra.mxu0 0.0
      %1002 = vmatprep.subr.mxu0 0.0
      %1003 = vmatpush1.msra.mxu0 0.0
      %1004 = vmatprep.subr.mxu0 0.0
      %1005 = vmatpush1.msra.mxu0 0.0
      %1006 = vmatprep.subr.mxu0 0.0
      %1007 = vmatpush1.msra.mxu0 0.0
      %1008 = vmatprep.subr.mxu0 0.0
      %1009 = vmatpush1.msra.mxu0 0.0
      %1010 = vmatprep.subr.mxu0 0.0
      %1011 = vmatpush1.msra.mxu0 0.0
      %1012 = vmatprep.subr.mxu0 0.0
      %1013 = vmatpush1.msra.mxu0 0.0
      %1014 = vmatprep.subr.mxu0 0.0
      %1015 = vmatpush1.msra.mxu0 0.0
      %1016 = vmatprep.subr.mxu0 0.0
      %1017 = vmatpush1.msra.mxu0 0.0
      %1018 = vmatprep.subr.mxu0 0.0
      %1019 = vmatpush1.msra.mxu0 0.0
      %1020 = vmatprep.subr.mxu0 0.0
      %1021 = vmatpush1.msra.mxu0 0.0
      %1022 = vmatprep.subr.mxu0 0.0
      %1023 = vmatpush1.msra.mxu0 0.0
      %1024 = vmatprep.subr.mxu0 0.0
      %1025 = vmatpush1.msra.mxu0 0.0
      %1026 = vmatprep.subr.mxu0 0.0
      %1027 = vmatpush1.msra.mxu0 0.0
      %1028 = vmatprep.subr.mxu0 0.0
      %1029 = vmatpush1.msra.mxu0 0.0
      %1030 = vmatprep.subr.mxu0 0.0
      %1031 = vmatpush1.msra.mxu0 0.0
      %1032 = vmatprep.subr.mxu0 0.0
      %1033 = vmatpush1.msra.mxu0 0.0
      %1034 = vmatprep.subr.mxu0 0.0
      %1035 = vmatpush1.msra.mxu0 0.0
      %1036 = vmatprep.mubr.f32.mxu0 0.0
      %1037 = vmatmul.mubr.f32.gmra.mrb[0].mxu0 %v900
      %v1038 = vpop.f32.mrb[0].mxu0
      %v1039 = vadd.f32 %v969, %v1038
      %v1040 = vpop.f32.mrb[0].mxu0
      %1041 = vdwg.mxu0
      %v1042 = vld [vmem:[%s219] sm:$0xff]
      %v1043 = vadd.f32 %v1042, %v1039
      %vm1044 = vcmask 261120
      %1045 = vst.msk [vmem:[%s219] sm:$0xff] %vm1044, %v1043
      %p1046 = scmp.lt.s32.totalorder %s17, 1
      %s1047 = scalar_select %p1046, %s17, 1
      %s1048 = smul.addr %s1047, 8
      %s1049 = scalar_lea.vmem %s2, %s1048
      // Predicated region
      $region33: #{decoder_forward.1} parent=27 // pred_check
        %p1050 = pneg %p107
      $region34: #{decoder_forward.1} parent=27 // pred_check_branch
        %1052 = sbr.rel (%p1050) target = $region36
      $region35: #{decoder_forward.1} parent=27 // pred_region
        _
      $region36: #{decoder_forward.1} parent=27 // pred_fallthru
        _
    $region28: #{decoder_forward.1} parent=5 // pred_fallthru
      _
    %p1053 = scmp.le.s32.totalorder 2, %s8
    // Predicated region
    $region37: #{decoder_forward.1} parent=5 // pred_check
      %p1054 = pneg %p1053
    $region38: #{decoder_forward.1} parent=5 // pred_check_branch
      %1056 = sbr.rel (%p1054) target = $region40
    $region39: #{decoder_forward.1} parent=5 // pred_region
      %s1057 = ssub.s32 %s8, 2
      // Predicated region
      $region41: #{decoder_forward.1} parent=39 // pred_check
        %p1058 = pneg %p113
      $region42: #{decoder_forward.1} parent=39 // pred_check_branch
        %1060 = sbr.rel (%p1058) target = $region44
      $region43: #{decoder_forward.1} parent=39 // pred_region
        %p1061 = scmp.lt.s32.totalorder %s19, 1
        %s1062 = scalar_select %p1061, %s19, 1
        %s1063 = smul.addr %s1062, 8
        %s1064 = scalar_lea.vmem %s2, %s1063
      $region44: #{decoder_forward.1} parent=39 // pred_fallthru
        _
    $region40: #{decoder_forward.1} parent=5 // pred_fallthru
      _
  $region6: #{decoder_forward.1} parent=0 // loop_footer
    %s12 = sadd.s32 1, %s8
  $region7: #{decoder_forward.1} parent=0 // loop_footer_branch
    %7 = sbr.rel target = $region3
  $region8: #{decoder_forward.1} parent=0 // loop_exit
    _

</llo_original>
